<compile_context>
chip_gen: v7x
topology: tpu7x:2x2x1
jax: 0.10.0
libtpu: 0.0.40
codegen_flags: <defaults>
</compile_context>

<pallas_src>
import math
import numpy as np
import jax
import jax.numpy as jnp
from jax import lax
from jax.experimental import pallas as pl
from jax.experimental.pallas import tpu as pltpu

# ------------------------- problem sizes (small, deterministic) -------------------------
B, T, C, H = 2, 8, 32, 4          # batch, seq, dim, n_heads
D = C // H                        # head_dim
BT = B * T                        # folded row count (row = b*T + t)
FF = 4 * C                        # FFN hidden dim
EPS = 1e-6                        # RMSNorm eps (matches module)

# packed-weight lane offsets: wpack = [ W1^T (FF) | Wout^T (C) | Wqkv_ext (5C) ]
OFF_W1 = 0
OFF_WO = FF
OFF_QKV = FF + C
WPACK_W = FF + C + 5 * C


def _erf(x):
    # Abramowitz & Stegun 7.1.26 rational approximation (max abs err ~1.5e-7).
    a1, a2, a3, a4, a5 = 0.254829592, -0.284496736, 1.421413741, -1.453152027, 1.061405429
    p = 0.3275911
    ax = jnp.abs(x)
    t = 1.0 / (1.0 + p * ax)
    poly = ((((a5 * t + a4) * t + a3) * t + a2) * t + a1) * t
    y = 1.0 - poly * jnp.exp(-ax * ax)
    return jnp.where(x >= 0, y, -y)


def _gelu_exact(x):
    # nn.GELU() default = exact (erf) GELU
    return 0.5 * x * (1.0 + _erf(x * (1.0 / math.sqrt(2.0))))


# ------------------------------------ the kernel ----------------------------------------
def transformer_block_kernel(x_ref, trig_ref, ac_ref, wpack_ref, w2_ref, vec_ref, o_ref):
    x = x_ref[...]                                   # (BT, C), batch folded into rows

    # packed per-channel vectors (row-stacked, zero-padded to FF lanes)
    wan = vec_ref[0:1, :C]
    wfn = vec_ref[1:2, :C]
    bout = vec_ref[2:3, :C]
    b2 = vec_ref[3:4, :C]
    b1 = vec_ref[4:5, :]

    # ---- attention RMSNorm ----
    ms = jnp.mean(x * x, axis=-1, keepdims=True)
    xn = x * lax.rsqrt(ms + EPS) * wan

    # ---- fused QKV + RoPE-swap projection: one (BT,C)@(C,5C) MXU matmul ----
    # columns: [ q*scale | k | v | (q@P)*scale | k@P ]   (scale = 1/sqrt(D), folded on host)
    qkv = jnp.dot(xn, wpack_ref[:, OFF_QKV:OFF_QKV + 5 * C],
                  preferred_element_type=jnp.float32)          # (BT, 5C)
    q = qkv[:, 0 * C:1 * C]
    k = qkv[:, 1 * C:2 * C]
    v = qkv[:, 2 * C:3 * C]
    qP = qkv[:, 3 * C:4 * C]
    kP = qkv[:, 4 * C:5 * C]

    # ---- RoPE: out = x*cos + swap_pairs(x)*sin_signed (swap already in qP/kP) ----
    cosf = trig_ref[:, :C]                            # (BT, C)
    sinf = trig_ref[:, C:]                            # (BT, C) signed: [-s0,+s0,-s1,+s1,...]
    q = q * cosf + qP * sinf                          # pre-scaled by 1/sqrt(D)
    k = k * cosf + kP * sinf

    # ---- head-batched attention (heads stacked along sublanes) ----
    bias = ac_ref[:, :BT]                             # (H*BT, BT) 0 valid / -1e30 invalid
    headmask = ac_ref[:, BT:]                         # (H*BT, C)  block-diag 0/1 head mask

    # block-diagonal Q: row block h keeps only lanes of head h -> one matmul for all heads
    qblk = jnp.concatenate([q] * H, axis=0) * headmask              # (H*BT, C)
    s = lax.dot_general(qblk, k, (((1,), (1,)), ((), ())),
                        preferred_element_type=jnp.float32) + bias  # (H*BT, BT)

    m = jnp.max(s, axis=-1, keepdims=True)
    e = jnp.exp(s - m)
    l = jnp.sum(e, axis=-1, keepdims=True)
    p = e / l                                         # exact divide (approx recip failed tol)

    # one PV matmul for all heads; mask off cross-head lanes and fold the head stack
    o_all = jnp.dot(p, v, preferred_element_type=jnp.float32) * headmask   # (H*BT, C)
    o = o_all[0:BT]
    for hh in range(1, H):
        o = o + o_all[hh * BT:(hh + 1) * BT]                                # (BT, C)

    # single fused output projection
    attn = jnp.dot(o, wpack_ref[:, OFF_WO:OFF_WO + C],
                   preferred_element_type=jnp.float32) + bout
    # TODO(synk): attention dropout (p=0.1) and FFN nn.Dropout(0.1) are identity in eval
    # mode; training-mode dropout is not modeled here.
    h1 = x + attn

    # ---- FFN ----
    ms2 = jnp.mean(h1 * h1, axis=-1, keepdims=True)
    hn = h1 * lax.rsqrt(ms2 + EPS) * wfn
    f = jnp.dot(hn, wpack_ref[:, OFF_W1:OFF_W1 + FF],
                preferred_element_type=jnp.float32) + b1
    f = _gelu_exact(f)
    f = jnp.dot(f, w2_ref[...], preferred_element_type=jnp.float32) + b2

    o_ref[...] = (h1 + f).astype(o_ref.dtype)


# ------------------------------------ the wrapper ---------------------------------------
def transformer_block(x2d, trig, attn_const, wpack, w2_t, vecpack):
    args = (x2d, trig, attn_const, wpack, w2_t, vecpack)
    vmem = lambda: pl.BlockSpec(memory_space=pltpu.MemorySpace.VMEM)
    return pl.pallas_call(
        transformer_block_kernel,
        out_shape=jax.ShapeDtypeStruct((BT, C), jnp.float32),
        in_specs=[vmem() for _ in args],
        out_specs=vmem(),
    )(*args)


# --------------------------------- pure-JAX reference -----------------------------------
def reference(x, cos_half, sin_half, wan, wqkv, wout, bout, wfn, w1, b1, w2, b2):
    hp = jax.lax.Precision.HIGHEST

    def rms(v, w):
        return v * lax.rsqrt(jnp.mean(v * v, -1, keepdims=True) + EPS) * w

    xn = rms(x, wan)
    qkv = jnp.einsum('btc,oc->bto', xn, wqkv, precision=hp)
    qkv = qkv.reshape(B, T, 3, H, D).transpose(2, 0, 3, 1, 4)
    q, k, v = qkv[0], qkv[1], qkv[2]                         # (B, H, T, D)

    def rope(u):
        ur = u.reshape(B, H, T, D // 2, 2)
        re = ur[..., 0] * cos_half - ur[..., 1] * sin_half
        im = ur[..., 0] * sin_half + ur[..., 1] * cos_half
        return jnp.stack([re, im], axis=-1).reshape(B, H, T, D)

    q, k = rope(q), rope(k)
    s = jnp.einsum('bhtd,bhsd->bhts', q, k, precision=hp) / math.sqrt(D)
    mask = jnp.tril(jnp.ones((T, T), bool))
    s = jnp.where(mask, s, -jnp.inf)
    p = jax.nn.softmax(s, -1)
    o = jnp.einsum('bhts,bhsd->bhtd', p, v, precision=hp)
    o = o.transpose(0, 2, 1, 3).reshape(B, T, C)
    attn = jnp.einsum('btc,oc->bto', o, wout, precision=hp) + bout
    h = x + attn
    hn = rms(h, wfn)
    f = jnp.einsum('btc,oc->bto', hn, w1, precision=hp) + b1
    f = jax.nn.gelu(f, approximate=False)
    f = jnp.einsum('bto,co->btc', f, w2, precision=hp) + b2
    return h + f


# ---------------------------------------- main ------------------------------------------
if __name__ == "__main__":
    key = jax.random.PRNGKey(0)
    ks = jax.random.split(key, 10)

    x = jax.random.normal(ks[0], (B, T, C), jnp.float32)

    # deterministic synthetic parameters (PyTorch nn.Linear layout: (out, in))
    wqkv = jax.random.normal(ks[1], (3 * C, C), jnp.float32) / math.sqrt(C)
    wout = jax.random.normal(ks[2], (C, C), jnp.float32) / math.sqrt(C)
    bout = jax.random.normal(ks[3], (C,), jnp.float32) * 0.02
    w1 = jax.random.normal(ks[4], (4 * C, C), jnp.float32) / math.sqrt(C)
    b1 = jax.random.normal(ks[5], (4 * C,), jnp.float32) * 0.02
    w2 = jax.random.normal(ks[6], (C, 4 * C), jnp.float32) / math.sqrt(4 * C)
    b2 = jax.random.normal(ks[7], (C,), jnp.float32) * 0.02
    wan = 1.0 + 0.1 * jax.random.normal(ks[8], (C,), jnp.float32)   # RMSNorm weights
    wfn = 1.0 + 0.1 * jax.random.normal(ks[9], (C,), jnp.float32)

    # rotary embedding tables (freqs_cis), Llama-style, theta=10000
    inv_freq = 1.0 / (10000.0 ** (np.arange(0, D, 2, dtype=np.float64) / D))
    ang = np.outer(np.arange(T, dtype=np.float64), inv_freq)          # (T, D/2)
    cos_half = np.cos(ang).astype(np.float32)
    sin_half = np.sin(ang).astype(np.float32)
    cosf = np.repeat(cos_half, 2, axis=1)                             # (T, D) [c0,c0,c1,c1,..]
    sinf = np.repeat(sin_half, 2, axis=1) * np.tile(
        np.array([-1.0, 1.0], np.float32), D // 2)                    # (T, D) [-s0,+s0,..]
    cos_full = np.tile(cosf, (B, H)).astype(np.float32)               # (BT, C), row = b*T + t
    sin_full = np.tile(sinf, (B, H)).astype(np.float32)
    trig = np.concatenate([cos_full, sin_full], axis=1)               # (BT, 2C)

    # (C, C) adjacent-pair swap; block-diagonal over heads (exact 0/1 permutation)
    permC = np.zeros((C, C), np.float32)
    for i in range(0, C, 2):
        permC[i, i + 1] = 1.0
        permC[i + 1, i] = 1.0

    # additive mask: valid iff same batch element AND causal; tiled over heads (sublane stack)
    rows = np.arange(BT)
    b_idx, t_idx = rows // T, rows % T
    valid = (b_idx[:, None] == b_idx[None, :]) & (t_idx[None, :] <= t_idx[:, None])
    bias = np.where(valid, 0.0, -1e30).astype(np.float32)             # (BT, BT)
    bias_all = np.tile(bias, (H, 1)).astype(np.float32)               # (H*BT, BT)

    # block-diagonal head mask (row block h keeps only lanes of head h)
    headmask = np.zeros((H * BT, C), np.float32)
    for h in range(H):
        headmask[h * BT:(h + 1) * BT, h * D:(h + 1) * D] = 1.0
    attn_const = np.concatenate([bias_all, headmask], axis=1)         # (H*BT, BT + C)

    # fused QKV + RoPE-swap weight, attention scale folded into the q columns
    scale = 1.0 / math.sqrt(D)
    wqkv_t = np.asarray(wqkv).T                                       # (C, 3C)
    Wq, Wk, Wv = wqkv_t[:, :C], wqkv_t[:, C:2 * C], wqkv_t[:, 2 * C:]
    wqkv_ext = np.concatenate(
        [Wq * scale, Wk, Wv, (Wq @ permC) * scale, Wk @ permC], axis=1).astype(np.float32)

    # packed weights: [ W1^T | Wout^T | Wqkv_ext ]  -> (C, 10C)
    wpack = np.concatenate(
        [np.asarray(w1).T, np.asarray(wout).T, wqkv_ext], axis=1).astype(np.float32)
    assert wpack.shape == (C, WPACK_W)

    # packed bias/gain vectors (rows: wan, wfn, bout, b2, b1) zero-padded to FF lanes
    vecpack = np.zeros((5, FF), np.float32)
    vecpack[0, :C] = np.asarray(wan)
    vecpack[1, :C] = np.asarray(wfn)
    vecpack[2, :C] = np.asarray(bout)
    vecpack[3, :C] = np.asarray(b2)
    vecpack[4, :] = np.asarray(b1)

    out2d = transformer_block(
        x.reshape(BT, C),
        jnp.asarray(trig),
        jnp.asarray(attn_const),
        jnp.asarray(wpack),
        jnp.asarray(np.asarray(w2).T),       # (4C, C)
        jnp.asarray(vecpack),
    )
    out2d = jax.block_until_ready(out2d)
    out = np.asarray(out2d).reshape(B, T, C)

    ref = reference(x, jnp.asarray(cos_half), jnp.asarray(sin_half),
                    wan, wqkv, wout, bout, wfn, w1, b1, w2, b2)
    ref = jax.block_until_ready(ref)

    assert out.shape == (B, T, C)
    assert np.isfinite(out).all()
    np.testing.assert_allclose(out, np.asarray(ref), rtol=2e-3, atol=2e-3)

    print("KERNEL_OK")
</pallas_src>

<mosaic_0001>
module attributes {stable_mosaic.version = 11 : i64} {
  func.func @transformer_block_kernel(%arg0: memref<16x32xf32, #tpu.memory_space<vmem>>, %arg1: memref<16x64xf32, #tpu.memory_space<vmem>>, %arg2: memref<64x48xf32, #tpu.memory_space<vmem>>, %arg3: memref<32x320xf32, #tpu.memory_space<vmem>>, %arg4: memref<128x32xf32, #tpu.memory_space<vmem>>, %arg5: memref<5x128xf32, #tpu.memory_space<vmem>>, %arg6: memref<16x32xf32, #tpu.memory_space<vmem>>) attributes {dimension_semantics = [], scalar_prefetch = 0 : i64, scratch_operands = 0 : i64, tpu.core_type = #tpu.core_type<tc>} {
    %c0 = arith.constant 0 : index
    %c0_0 = arith.constant 0 : index
    %0 = vector.load %arg0[%c0, %c0_0] : memref<16x32xf32, #tpu.memory_space<vmem>>, vector<16x32xf32>
    %c0_1 = arith.constant 0 : index
    %c0_2 = arith.constant 0 : index
    %1 = vector.load %arg5[%c0_1, %c0_2] : memref<5x128xf32, #tpu.memory_space<vmem>>, vector<1x32xf32>
    %c1 = arith.constant 1 : index
    %c0_3 = arith.constant 0 : index
    %2 = vector.load %arg5[%c1, %c0_3] : memref<5x128xf32, #tpu.memory_space<vmem>>, vector<1x32xf32>
    %c2 = arith.constant 2 : index
    %c0_4 = arith.constant 0 : index
    %3 = vector.load %arg5[%c2, %c0_4] : memref<5x128xf32, #tpu.memory_space<vmem>>, vector<1x32xf32>
    %c3 = arith.constant 3 : index
    %c0_5 = arith.constant 0 : index
    %4 = vector.load %arg5[%c3, %c0_5] : memref<5x128xf32, #tpu.memory_space<vmem>>, vector<1x32xf32>
    %c4 = arith.constant 4 : index
    %c0_6 = arith.constant 0 : index
    %5 = vector.load %arg5[%c4, %c0_6] : memref<5x128xf32, #tpu.memory_space<vmem>>, vector<1x128xf32>
    %6 = arith.mulf %0, %0 : vector<16x32xf32>
    %cst = arith.constant dense<0.000000e+00> : vector<16xf32>
    %7 = vector.multi_reduction <add>, %6, %cst [1] : vector<16x32xf32> to vector<16xf32>
    %8 = vector.shape_cast %7 : vector<16xf32> to vector<16x1xf32>
    %cst_7 = arith.constant 3.200000e+01 : f32
    %9 = vector.broadcast %cst_7 : f32 to vector<16x1xf32>
    %10 = arith.divf %8, %9 : vector<16x1xf32>
    %cst_8 = arith.constant 9.99999997E-7 : f32
    %11 = vector.broadcast %cst_8 : f32 to vector<16x1xf32>
    %12 = arith.addf %10, %11 : vector<16x1xf32>
    %13 = math.rsqrt %12 : vector<16x1xf32>
    %14 = vector.broadcast %13 : vector<16x1xf32> to vector<16x32xf32>
    %15 = arith.mulf %0, %14 : vector<16x32xf32>
    %16 = vector.broadcast %1 : vector<1x32xf32> to vector<16x32xf32>
    %17 = arith.mulf %15, %16 : vector<16x32xf32>
    %c0_9 = arith.constant 0 : index
    %c160 = arith.constant 160 : index
    %18 = vector.load %arg3[%c0_9, %c160] : memref<32x320xf32, #tpu.memory_space<vmem>>, vector<32x160xf32>
    %cst_10 = arith.constant dense<0.000000e+00> : vector<16x160xf32>
    %19 = tpu.matmul %17, %18, %cst_10 {dimension_numbers = #tpu.dot_dimension_numbers<[1], [0], [0], [1], [0, 0, 1, 1], [], []>} : vector<16x32xf32>, vector<32x160xf32>, vector<16x160xf32> -> vector<16x160xf32>
    %20 = vector.extract_strided_slice %19 {offsets = [0, 0], sizes = [16, 32], strides = [1, 1]} : vector<16x160xf32> to vector<16x32xf32>
    %21 = vector.extract_strided_slice %19 {offsets = [0, 32], sizes = [16, 32], strides = [1, 1]} : vector<16x160xf32> to vector<16x32xf32>
    %22 = vector.extract_strided_slice %19 {offsets = [0, 64], sizes = [16, 32], strides = [1, 1]} : vector<16x160xf32> to vector<16x32xf32>
    %23 = vector.extract_strided_slice %19 {offsets = [0, 96], sizes = [16, 32], strides = [1, 1]} : vector<16x160xf32> to vector<16x32xf32>
    %24 = vector.extract_strided_slice %19 {offsets = [0, 128], sizes = [16, 32], strides = [1, 1]} : vector<16x160xf32> to vector<16x32xf32>
    %c0_11 = arith.constant 0 : index
    %c0_12 = arith.constant 0 : index
    %25 = vector.load %arg1[%c0_11, %c0_12] : memref<16x64xf32, #tpu.memory_space<vmem>>, vector<16x32xf32>
    %c0_13 = arith.constant 0 : index
    %c32 = arith.constant 32 : index
    %26 = vector.load %arg1[%c0_13, %c32] : memref<16x64xf32, #tpu.memory_space<vmem>>, vector<16x32xf32>
    %27 = arith.mulf %20, %25 : vector<16x32xf32>
    %28 = arith.mulf %23, %26 : vector<16x32xf32>
    %29 = arith.addf %27, %28 : vector<16x32xf32>
    %30 = arith.mulf %21, %25 : vector<16x32xf32>
    %31 = arith.mulf %24, %26 : vector<16x32xf32>
    %32 = arith.addf %30, %31 : vector<16x32xf32>
    %c0_14 = arith.constant 0 : index
    %c0_15 = arith.constant 0 : index
    %33 = vector.load %arg2[%c0_14, %c0_15] : memref<64x48xf32, #tpu.memory_space<vmem>>, vector<64x16xf32>
    %c0_16 = arith.constant 0 : index
    %c16 = arith.constant 16 : index
    %34 = vector.load %arg2[%c0_16, %c16] : memref<64x48xf32, #tpu.memory_space<vmem>>, vector<64x32xf32>
    %35 = tpu.concatenate %29, %29, %29, %29 in 0 : vector<16x32xf32>, vector<16x32xf32>, vector<16x32xf32>, vector<16x32xf32> -> vector<64x32xf32>
    %36 = arith.mulf %35, %34 : vector<64x32xf32>
    %cst_17 = arith.constant dense<0.000000e+00> : vector<64x16xf32>
    %37 = tpu.matmul %36, %32, %cst_17 {dimension_numbers = #tpu.dot_dimension_numbers<[1], [1], [0], [0], [0, 0, 1, 0], [], []>} : vector<64x32xf32>, vector<16x32xf32>, vector<64x16xf32> -> vector<64x16xf32>
    %38 = arith.addf %37, %33 : vector<64x16xf32>
    %cst_18 = arith.constant dense<0xFF800000> : vector<64xf32>
    %39 = vector.multi_reduction <maximumf>, %38, %cst_18 [1] : vector<64x16xf32> to vector<64xf32>
    %40 = vector.shape_cast %39 : vector<64xf32> to vector<64x1xf32>
    %41 = vector.broadcast %40 : vector<64x1xf32> to vector<64x16xf32>
    %42 = arith.subf %38, %41 : vector<64x16xf32>
    %43 = math.exp %42 : vector<64x16xf32>
    %cst_19 = arith.constant dense<0.000000e+00> : vector<64xf32>
    %44 = vector.multi_reduction <add>, %43, %cst_19 [1] : vector<64x16xf32> to vector<64xf32>
    %45 = vector.shape_cast %44 : vector<64xf32> to vector<64x1xf32>
    %46 = vector.broadcast %45 : vector<64x1xf32> to vector<64x16xf32>
    %47 = arith.divf %43, %46 : vector<64x16xf32>
    %cst_20 = arith.constant dense<0.000000e+00> : vector<64x32xf32>
    %48 = tpu.matmul %47, %22, %cst_20 {dimension_numbers = #tpu.dot_dimension_numbers<[1], [0], [0], [1], [0, 0, 1, 1], [], []>} : vector<64x16xf32>, vector<16x32xf32>, vector<64x32xf32> -> vector<64x32xf32>
    %49 = arith.mulf %48, %34 : vector<64x32xf32>
    %50 = vector.extract_strided_slice %49 {offsets = [0, 0], sizes = [16, 32], strides = [1, 1]} : vector<64x32xf32> to vector<16x32xf32>
    %51 = vector.extract_strided_slice %49 {offsets = [16, 0], sizes = [16, 32], strides = [1, 1]} : vector<64x32xf32> to vector<16x32xf32>
    %52 = arith.addf %50, %51 : vector<16x32xf32>
    %53 = vector.extract_strided_slice %49 {offsets = [32, 0], sizes = [16, 32], strides = [1, 1]} : vector<64x32xf32> to vector<16x32xf32>
    %54 = arith.addf %52, %53 : vector<16x32xf32>
    %55 = vector.extract_strided_slice %49 {offsets = [48, 0], sizes = [16, 32], strides = [1, 1]} : vector<64x32xf32> to vector<16x32xf32>
    %56 = arith.addf %54, %55 : vector<16x32xf32>
    %c0_21 = arith.constant 0 : index
    %c128 = arith.constant 128 : index
    %57 = vector.load %arg3[%c0_21, %c128] : memref<32x320xf32, #tpu.memory_space<vmem>>, vector<32x32xf32>
    %cst_22 = arith.constant dense<0.000000e+00> : vector<16x32xf32>
    %58 = tpu.matmul %56, %57, %cst_22 {dimension_numbers = #tpu.dot_dimension_numbers<[1], [0], [0], [1], [0, 0, 1, 1], [], []>} : vector<16x32xf32>, vector<32x32xf32>, vector<16x32xf32> -> vector<16x32xf32>
    %59 = vector.broadcast %3 : vector<1x32xf32> to vector<16x32xf32>
    %60 = arith.addf %58, %59 : vector<16x32xf32>
    %61 = arith.addf %0, %60 : vector<16x32xf32>
    %62 = arith.mulf %61, %61 : vector<16x32xf32>
    %cst_23 = arith.constant dense<0.000000e+00> : vector<16xf32>
    %63 = vector.multi_reduction <add>, %62, %cst_23 [1] : vector<16x32xf32> to vector<16xf32>
    %64 = vector.shape_cast %63 : vector<16xf32> to vector<16x1xf32>
    %cst_24 = arith.constant 3.200000e+01 : f32
    %65 = vector.broadcast %cst_24 : f32 to vector<16x1xf32>
    %66 = arith.divf %64, %65 : vector<16x1xf32>
    %cst_25 = arith.constant 9.99999997E-7 : f32
    %67 = vector.broadcast %cst_25 : f32 to vector<16x1xf32>
    %68 = arith.addf %66, %67 : vector<16x1xf32>
    %69 = math.rsqrt %68 : vector<16x1xf32>
    %70 = vector.broadcast %69 : vector<16x1xf32> to vector<16x32xf32>
    %71 = arith.mulf %61, %70 : vector<16x32xf32>
    %72 = vector.broadcast %2 : vector<1x32xf32> to vector<16x32xf32>
    %73 = arith.mulf %71, %72 : vector<16x32xf32>
    %c0_26 = arith.constant 0 : index
    %c0_27 = arith.constant 0 : index
    %74 = vector.load %arg3[%c0_26, %c0_27] : memref<32x320xf32, #tpu.memory_space<vmem>>, vector<32x128xf32>
    %cst_28 = arith.constant dense<0.000000e+00> : vector<16x128xf32>
    %75 = tpu.matmul %73, %74, %cst_28 {dimension_numbers = #tpu.dot_dimension_numbers<[1], [0], [0], [1], [0, 0, 1, 1], [], []>} : vector<16x32xf32>, vector<32x128xf32>, vector<16x128xf32> -> vector<16x128xf32>
    %76 = vector.broadcast %5 : vector<1x128xf32> to vector<16x128xf32>
    %77 = arith.addf %75, %76 : vector<16x128xf32>
    %cst_29 = arith.constant 5.000000e-01 : f32
    %78 = vector.broadcast %cst_29 : f32 to vector<16x128xf32>
    %79 = arith.mulf %78, %77 : vector<16x128xf32>
    %cst_30 = arith.constant 0.707106769 : f32
    %80 = vector.broadcast %cst_30 : f32 to vector<16x128xf32>
    %81 = arith.mulf %77, %80 : vector<16x128xf32>
    %82 = math.absf %81 : vector<16x128xf32>
    %cst_31 = arith.constant 0.327591091 : f32
    %83 = vector.broadcast %cst_31 : f32 to vector<16x128xf32>
    %84 = arith.mulf %83, %82 : vector<16x128xf32>
    %cst_32 = arith.constant 1.000000e+00 : f32
    %85 = vector.broadcast %cst_32 : f32 to vector<16x128xf32>
    %86 = arith.addf %85, %84 : vector<16x128xf32>
    %cst_33 = arith.constant 1.000000e+00 : f32
    %87 = vector.broadcast %cst_33 : f32 to vector<16x128xf32>
    %88 = arith.divf %87, %86 : vector<16x128xf32>
    %cst_34 = arith.constant 1.06140542 : f32
    %89 = vector.broadcast %cst_34 : f32 to vector<16x128xf32>
    %90 = arith.mulf %89, %88 : vector<16x128xf32>
    %cst_35 = arith.constant -1.45315206 : f32
    %91 = vector.broadcast %cst_35 : f32 to vector<16x128xf32>
    %92 = arith.addf %90, %91 : vector<16x128xf32>
    %93 = arith.mulf %92, %88 : vector<16x128xf32>
    %cst_36 = arith.constant 1.42141378 : f32
    %94 = vector.broadcast %cst_36 : f32 to vector<16x128xf32>
    %95 = arith.addf %93, %94 : vector<16x128xf32>
    %96 = arith.mulf %95, %88 : vector<16x128xf32>
    %cst_37 = arith.constant -0.284496725 : f32
    %97 = vector.broadcast %cst_37 : f32 to vector<16x128xf32>
    %98 = arith.addf %96, %97 : vector<16x128xf32>
    %99 = arith.mulf %98, %88 : vector<16x128xf32>
    %cst_38 = arith.constant 0.254829586 : f32
    %100 = vector.broadcast %cst_38 : f32 to vector<16x128xf32>
    %101 = arith.addf %99, %100 : vector<16x128xf32>
    %102 = arith.mulf %101, %88 : vector<16x128xf32>
    %cst_39 = arith.constant 0.000000e+00 : f32
    %103 = vector.broadcast %cst_39 : f32 to vector<16x128xf32>
    %104 = arith.subf %103, %82 : vector<16x128xf32>
    %105 = arith.mulf %104, %82 : vector<16x128xf32>
    %106 = math.exp %105 : vector<16x128xf32>
    %107 = arith.mulf %102, %106 : vector<16x128xf32>
    %cst_40 = arith.constant 1.000000e+00 : f32
    %108 = vector.broadcast %cst_40 : f32 to vector<16x128xf32>
    %109 = arith.subf %108, %107 : vector<16x128xf32>
    %cst_41 = arith.constant 0.000000e+00 : f32
    %110 = vector.broadcast %cst_41 : f32 to vector<16x128xf32>
    %111 = arith.cmpf oge, %81, %110 : vector<16x128xf32>
    %cst_42 = arith.constant 0.000000e+00 : f32
    %112 = vector.broadcast %cst_42 : f32 to vector<16x128xf32>
    %113 = arith.subf %112, %109 : vector<16x128xf32>
    %114 = arith.select %111, %109, %113 : vector<16x128xi1>, vector<16x128xf32>
    %cst_43 = arith.constant 1.000000e+00 : f32
    %115 = vector.broadcast %cst_43 : f32 to vector<16x128xf32>
    %116 = arith.addf %115, %114 : vector<16x128xf32>
    %117 = arith.mulf %79, %116 : vector<16x128xf32>
    %c0_44 = arith.constant 0 : index
    %c0_45 = arith.constant 0 : index
    %118 = vector.load %arg4[%c0_44, %c0_45] : memref<128x32xf32, #tpu.memory_space<vmem>>, vector<128x32xf32>
    %cst_46 = arith.constant dense<0.000000e+00> : vector<16x32xf32>
    %119 = tpu.matmul %117, %118, %cst_46 {dimension_numbers = #tpu.dot_dimension_numbers<[1], [0], [0], [1], [0, 0, 1, 1], [], []>} : vector<16x128xf32>, vector<128x32xf32>, vector<16x32xf32> -> vector<16x32xf32>
    %120 = vector.broadcast %4 : vector<1x32xf32> to vector<16x32xf32>
    %121 = arith.addf %119, %120 : vector<16x32xf32>
    %122 = arith.addf %61, %121 : vector<16x32xf32>
    %c0_47 = arith.constant 0 : index
    %c0_48 = arith.constant 0 : index
    %123 = vector.load %arg6[%c0_47, %c0_48] : memref<16x32xf32, #tpu.memory_space<vmem>>, vector<16x32xf32>
    tpu.vector_store %arg6[%c0_47, %c0_48], %122 {strides = array<i32>} : memref<16x32xf32, #tpu.memory_space<vmem>>, vector<16x32xf32>,
    return
  }
}

</mosaic_0001>

<llo_original>
// kernel: tpu_custom_call.1
$region0: #{tpu_custom_call.1}
  #allocation0 [shape = 'u32[]', space=smem, size = 0x4, offset = 0x4, fixed_abs, tag = 'smem constant byte address 0x4 - core index']
  #allocation1 [shape = 'u32[144,128]{1,0:T(1,128)}', space=vmem, size = 0x12000, scoped, tag = 'internal scratch']
  %s0 = inlined_call_operand.vmem [shape: f32[16,32], index: 0, kind: input, shape index: {}]
  %s1 = inlined_call_operand.vmem [shape: f32[16,64], index: 1, kind: input, shape index: {}]
  %s2 = inlined_call_operand.vmem [shape: f32[64,48], index: 2, kind: input, shape index: {}]
  %s3 = inlined_call_operand.vmem [shape: f32[32,320], index: 3, kind: input, shape index: {}]
  %s4 = inlined_call_operand.vmem [shape: f32[128,32], index: 4, kind: input, shape index: {}]
  %s5 = inlined_call_operand.vmem [shape: f32[5,128], index: 5, kind: input, shape index: {}]
  %s6 = inlined_call_operand.hbm [shape: f32[16,32], index: 6, kind: output, shape index: {}]
  %s7 = sld [smem:[#allocation0]]
  $region34: #{tpu_custom_call.1} parent=0
    _
  %s9 = ssub.s32 1, %s7
  %s10 = scalar_select 0, %s9, %s7
  $region1: #{tpu_custom_call.1} parent=0
    #allocation2 [shape = 'u8[8192]{0}', space=vmem, size = 0x2000, scoped, tag = 'output window, operand 0, single buffered']
    #allocation3 [shape = 's32[1]{0}', space=sflag, size = 0x4, scoped, tag = 'scoped memory for tpu_custom_call.1']
    %11 = vsyncpa [#allocation3], 0
    // Predicated region
    $region2: #{tpu_custom_call.1} parent=1 // pred_check
      _
    $region3: #{tpu_custom_call.1} parent=1 // pred_check_branch
      %13 = sbr.rel (0) target = $region5
    $region4: #{tpu_custom_call.1} parent=1 // pred_region
      _
    $region5: #{tpu_custom_call.1} parent=1 // pred_fallthru
      _
    // Predicated region
    $region6: #{tpu_custom_call.1} parent=1 // pred_check
      _
    $region7: #{tpu_custom_call.1} parent=1 // pred_check_branch
      %15 = sbr.rel (0) target = $region9
    $region8: #{tpu_custom_call.1} parent=1 // pred_region
      _
    $region9: #{tpu_custom_call.1} parent=1 // pred_fallthru
      _
    // Predicated region
    $region10: #{tpu_custom_call.1} parent=1 // pred_check
      _
    $region11: #{tpu_custom_call.1} parent=1 // pred_check_branch
      %17 = sbr.rel (0) target = $region13
    $region12: #{tpu_custom_call.1} parent=1 // pred_region
      _
    $region13: #{tpu_custom_call.1} parent=1 // pred_fallthru
      _
    // Predicated region
    $region14: #{tpu_custom_call.1} parent=1 // pred_check
      _
    $region15: #{tpu_custom_call.1} parent=1 // pred_check_branch
      %19 = sbr.rel (0) target = $region17
    $region16: #{tpu_custom_call.1} parent=1 // pred_region
      _
    $region17: #{tpu_custom_call.1} parent=1 // pred_fallthru
      _
    // Predicated region
    $region18: #{tpu_custom_call.1} parent=1 // pred_check
      _
    $region19: #{tpu_custom_call.1} parent=1 // pred_check_branch
      %21 = sbr.rel (0) target = $region21
    $region20: #{tpu_custom_call.1} parent=1 // pred_region
      _
    $region21: #{tpu_custom_call.1} parent=1 // pred_fallthru
      _
    // Predicated region
    $region22: #{tpu_custom_call.1} parent=1 // pred_check
      _
    $region23: #{tpu_custom_call.1} parent=1 // pred_check_branch
      %23 = sbr.rel (0) target = $region25
    $region24: #{tpu_custom_call.1} parent=1 // pred_region
      _
    $region25: #{tpu_custom_call.1} parent=1 // pred_fallthru
      _
    %v24 = vld [vmem:[%s0] sm:$0xff]
    %v25 = vld [vmem:[%s0 + $0x8] sm:$0xff]
    %v26 = vld [vmem:[%s5] sm:$0x1]
    %v27 = vld [vmem:[%s5 + $0x1] sm:$0x1]
    %v28 = vld [vmem:[%s5 + $0x2] sm:$0x1]
    %v29 = vld [vmem:[%s5 + $0x3] sm:$0x1]
    %v30 = vld [vmem:[%s5 + $0x4] sm:$0x1]
    %v31 = vmul.f32 %v24, %v24
    %v32 = vmul.f32 %v25, %v25
    %vm33 = vcmask 261120
    %v34 = vsel %vm33, %v31, 0.0
    %35 = vadd.xlane.f32.xlu0 %v34
    %v36 = vpop.xlane.xlu0 %35
    %v37 = vsel %vm33, %v32, 0.0
    %38 = vadd.xlane.f32.xlu0 %v37
    %v39 = vpop.xlane.xlu0 %38
    %v40 = vrcp.pop 32.0
    %v41 = vmul.f32 %v36, %v40
    %v42 = vmul.f32 %v39, %v40
    %v43 = vadd.f32 %v41, 1e-06
    %v44 = vadd.f32 %v42, 1e-06
    %v45 = vrsqrt.pop %v43
    %v46 = vrsqrt.pop %v44
    %v47 = vmul.f32 %v24, %v45
    %v48 = vmul.f32 %v25, %v46
    %v49 = vlaneseq
    %v50 = vshrl.u32 %v49, 7
    %v51 = vsub.s32 0, %v50
    %v52 = vrot.slane %v26, %v51
    %v53 = vmul.f32 %v47, %v52
    %v54 = vmul.f32 %v48, %v52
    %v55 = vld [vmem:[%s3 + $0x8] sm:$0xff]
    %v56 = vld [vmem:[%s3 + $0x10] sm:$0xff]
    %v57 = vld [vmem:[%s3 + $0x20] sm:$0xff]
    %v58 = vld [vmem:[%s3 + $0x28] sm:$0xff]
    %v59 = vld [vmem:[%s3 + $0x38] sm:$0xff]
    %v60 = vld [vmem:[%s3 + $0x40] sm:$0xff]
    %v61 = vld [vmem:[%s3 + $0x50] sm:$0xff]
    %v62 = vld [vmem:[%s3 + $0x58] sm:$0xff]
    %71 = vrot.lane.b32.xlu0 %v55, 96
    %v72 = vpop.permute.xlu0 %71
    %73 = vrot.lane.b32.xlu0 %v56, 96
    %v74 = vpop.permute.xlu0 %73
    %75 = vrot.lane.b32.xlu0 %v57, 96
    %v76 = vpop.permute.xlu0 %75
    %77 = vrot.lane.b32.xlu0 %v58, 96
    %v78 = vpop.permute.xlu0 %77
    %79 = vrot.lane.b32.xlu0 %v59, 96
    %v80 = vpop.permute.xlu0 %79
    %81 = vrot.lane.b32.xlu0 %v60, 96
    %v82 = vpop.permute.xlu0 %81
    %83 = vrot.lane.b32.xlu0 %v61, 96
    %v84 = vpop.permute.xlu0 %83
    %85 = vrot.lane.b32.xlu0 %v62, 96
    %v86 = vpop.permute.xlu0 %85
    %vm87 = vcmask 785408
    %v88 = vsel %vm87, %v72, %v74
    %v89 = vsel %vm87, %v76, %v78
    %v90 = vsel %vm87, %v80, %v82
    %v91 = vsel %vm87, %v84, %v86
    %v101 = vsel %vm33, %v53, 0
    %v104 = vsel %vm33, %v54, 0
    %106 = vmatprep.subr.mxu0 %v74
    %107 = vmatpush1.msra.mxu0 %v88
    %108 = vmatprep.subr.mxu0 %v78
    %109 = vmatpush1.msra.mxu0 %v89
    %110 = vmatprep.subr.mxu0 %v82
    %111 = vmatpush1.msra.mxu0 %v90
    %112 = vmatprep.subr.mxu0 %v86
    %113 = vmatpush1.msra.mxu0 %v91
    %114 = vmatprep.subr.mxu0 0.0
    %115 = vmatpush1.msra.mxu0 0.0
    %116 = vmatprep.subr.mxu0 0.0
    %117 = vmatpush1.msra.mxu0 0.0
    %118 = vmatprep.subr.mxu0 0.0
    %119 = vmatpush1.msra.mxu0 0.0
    %120 = vmatprep.subr.mxu0 0.0
    %121 = vmatpush1.msra.mxu0 0.0
    %122 = vmatprep.subr.mxu0 0.0
    %123 = vmatpush1.msra.mxu0 0.0
    %124 = vmatprep.subr.mxu0 0.0
    %125 = vmatpush1.msra.mxu0 0.0
    %126 = vmatprep.subr.mxu0 0.0
    %127 = vmatpush1.msra.mxu0 0.0
    %128 = vmatprep.subr.mxu0 0.0
    %129 = vmatpush1.msra.mxu0 0.0
    %130 = vmatprep.subr.mxu0 0.0
    %131 = vmatpush1.msra.mxu0 0.0
    %132 = vmatprep.subr.mxu0 0.0
    %133 = vmatpush1.msra.mxu0 0.0
    %134 = vmatprep.subr.mxu0 0.0
    %135 = vmatpush1.msra.mxu0 0.0
    %136 = vmatprep.subr.mxu0 0.0
    %137 = vmatpush1.msra.mxu0 0.0
    %138 = vmatprep.subr.mxu0 0.0
    %139 = vmatpush1.msra.mxu0 0.0
    %140 = vmatprep.subr.mxu0 0.0
    %141 = vmatpush1.msra.mxu0 0.0
    %142 = vmatprep.subr.mxu0 0.0
    %143 = vmatpush1.msra.mxu0 0.0
    %144 = vmatprep.subr.mxu0 0.0
    %145 = vmatpush1.msra.mxu0 0.0
    %146 = vmatprep.subr.mxu0 0.0
    %147 = vmatpush1.msra.mxu0 0.0
    %148 = vmatprep.subr.mxu0 0.0
    %149 = vmatpush1.msra.mxu0 0.0
    %150 = vmatprep.subr.mxu0 0.0
    %151 = vmatpush1.msra.mxu0 0.0
    %152 = vmatprep.subr.mxu0 0.0
    %153 = vmatpush1.msra.mxu0 0.0
    %154 = vmatprep.subr.mxu0 0.0
    %155 = vmatpush1.msra.mxu0 0.0
    %156 = vmatprep.subr.mxu0 0.0
    %157 = vmatpush1.msra.mxu0 0.0
    %158 = vmatprep.subr.mxu0 0.0
    %159 = vmatpush1.msra.mxu0 0.0
    %160 = vmatprep.subr.mxu0 0.0
    %161 = vmatpush1.msra.mxu0 0.0
    %162 = vmatprep.subr.mxu0 0.0
    %163 = vmatpush1.msra.mxu0 0.0
    %164 = vmatprep.subr.mxu0 0.0
    %165 = vmatpush1.msra.mxu0 0.0
    %166 = vmatprep.subr.mxu0 0.0
    %167 = vmatpush1.msra.mxu0 0.0
    %168 = vmatprep.subr.mxu0 0.0
    %169 = vmatpush1.msra.mxu0 0.0
    %170 = vmatprep.mubr.f32.mxu0 0.0
    %171 = vmatmul.mubr.f32.gmra.mrb[0].mxu0 %v101
    %v172 = vpop.f32.mrb[0].mxu0
    %v173 = vadd.f32 0.0, %v172
    %v174 = vpop.f32.mrb[0].mxu0
    %v175 = vadd.f32 0.0, %v174
    %176 = vmatprep.mubr.f32.mxu0 0.0
    %177 = vmatmul.mubr.f32.gmra.mrb[0].mxu0 %v104
    %v178 = vpop.f32.mrb[0].mxu0
    %v179 = vadd.f32 0.0, %v178
    %v180 = vpop.f32.mrb[0].mxu0
    %v181 = vadd.f32 0.0, %v180
    %182 = vdwg.mxu0
    %v183 = vld [vmem:[%s1] sm:$0xff]
    %v184 = vld [vmem:[%s1 + $0x8] sm:$0xff]
    %v185 = vmul.f32 %v173, %v183
    %v186 = vmul.f32 %v179, %v184
    %189 = vrot.lane.b32.xlu0 %v183, 64
    %v190 = vpop.permute.xlu0 %189
    %191 = vrot.lane.b32.xlu0 %v184, 64
    %v192 = vpop.permute.xlu0 %191
    %v195 = vmul.f32 %v173, %v190
    %v196 = vmul.f32 %v179, %v192
    %199 = vrot.lane.b32.xlu0 %v195, 32
    %v200 = vpop.permute.xlu0 %199
    %201 = vrot.lane.b32.xlu0 %v196, 32
    %v202 = vpop.permute.xlu0 %201
    %v205 = vadd.f32 %v185, %v200
    %v206 = vadd.f32 %v186, %v202
    %207 = vrot.lane.b32.xlu0 %v183, 32
    %v208 = vpop.permute.xlu0 %207
    %209 = vrot.lane.b32.xlu0 %v184, 32
    %v210 = vpop.permute.xlu0 %209
    %v213 = vmul.f32 %v173, %v208
    %v214 = vmul.f32 %v179, %v210
    %215 = vrot.lane.b32.xlu0 %v183, 96
    %v216 = vpop.permute.xlu0 %215
    %217 = vrot.lane.b32.xlu0 %v184, 96
    %v218 = vpop.permute.xlu0 %217
    %v221 = vmul.f32 %v175, %v216
    %v222 = vmul.f32 %v181, %v218
    %225 = vrot.lane.b32.xlu0 %v221, 32
    %v226 = vpop.permute.xlu0 %225
    %227 = vrot.lane.b32.xlu0 %v222, 32
    %v228 = vpop.permute.xlu0 %227
    %v231 = vadd.f32 %v213, %v226
    %v232 = vadd.f32 %v214, %v228
    %v233 = vld [vmem:[%s2] sm:$0xff]
    %v234 = vld [vmem:[%s2 + $0x8] sm:$0xff]
    %v235 = vld [vmem:[%s2 + $0x10] sm:$0xff]
    %v236 = vld [vmem:[%s2 + $0x18] sm:$0xff]
    %v237 = vld [vmem:[%s2 + $0x20] sm:$0xff]
    %v238 = vld [vmem:[%s2 + $0x28] sm:$0xff]
    %v239 = vld [vmem:[%s2 + $0x30] sm:$0xff]
    %v240 = vld [vmem:[%s2 + $0x38] sm:$0xff]
    %249 = vrot.lane.b32.xlu0 %v233, 112
    %v250 = vpop.permute.xlu0 %249
    %251 = vrot.lane.b32.xlu0 %v234, 112
    %v252 = vpop.permute.xlu0 %251
    %253 = vrot.lane.b32.xlu0 %v235, 112
    %v254 = vpop.permute.xlu0 %253
    %255 = vrot.lane.b32.xlu0 %v236, 112
    %v256 = vpop.permute.xlu0 %255
    %257 = vrot.lane.b32.xlu0 %v237, 112
    %v258 = vpop.permute.xlu0 %257
    %259 = vrot.lane.b32.xlu0 %v238, 112
    %v260 = vpop.permute.xlu0 %259
    %261 = vrot.lane.b32.xlu0 %v239, 112
    %v262 = vpop.permute.xlu0 %261
    %263 = vrot.lane.b32.xlu0 %v240, 112
    %v264 = vpop.permute.xlu0 %263
    %v273 = vmul.f32 %v205, %v250
    %v274 = vmul.f32 %v206, %v252
    %v275 = vmul.f32 %v205, %v254
    %v276 = vmul.f32 %v206, %v256
    %v277 = vmul.f32 %v205, %v258
    %v278 = vmul.f32 %v206, %v260
    %v279 = vmul.f32 %v205, %v262
    %v280 = vmul.f32 %v206, %v264
    %283 = vrot.lane.b32.xlu0 %v231, 96
    %v284 = vpop.permute.xlu0 %283
    %285 = vrot.lane.b32.xlu0 %v232, 96
    %v286 = vpop.permute.xlu0 %285
    %v288 = vsel %vm33, %v273, 0
    %v291 = vsel %vm33, %v274, 0
    %v294 = vsel %vm33, %v275, 0
    %v297 = vsel %vm33, %v276, 0
    %v300 = vsel %vm33, %v277, 0
    %v303 = vsel %vm33, %v278, 0
    %v306 = vsel %vm33, %v279, 0
    %v309 = vsel %vm33, %v280, 0
    %v311 = vsel %vm33, %v284, 0
    %v313 = vsel %vm33, %v286, 0
    %315 = vmatprep.subr.mxu0 0.0
    %316 = vmatpush1.xpose.msra.mxu0 %v311
    %317 = vmatprep.subr.mxu0 0.0
    %318 = vmatpush1.xpose.msra.mxu0 %v313
    %319 = vmatprep.subr.mxu0 0.0
    %320 = vmatpush1.xpose.msra.mxu0 0.0
    %321 = vmatprep.subr.mxu0 0.0
    %322 = vmatpush1.xpose.msra.mxu0 0.0
    %323 = vmatprep.subr.mxu0 0.0
    %324 = vmatpush1.xpose.msra.mxu0 0.0
    %325 = vmatprep.subr.mxu0 0.0
    %326 = vmatpush1.xpose.msra.mxu0 0.0
    %327 = vmatprep.subr.mxu0 0.0
    %328 = vmatpush1.xpose.msra.mxu0 0.0
    %329 = vmatprep.subr.mxu0 0.0
    %330 = vmatpush1.xpose.msra.mxu0 0.0
    %331 = vmatprep.subr.mxu0 0.0
    %332 = vmatpush1.xpose.msra.mxu0 0.0
    %333 = vmatprep.subr.mxu0 0.0
    %334 = vmatpush1.xpose.msra.mxu0 0.0
    %335 = vmatprep.subr.mxu0 0.0
    %336 = vmatpush1.xpose.msra.mxu0 0.0
    %337 = vmatprep.subr.mxu0 0.0
    %338 = vmatpush1.xpose.msra.mxu0 0.0
    %339 = vmatprep.subr.mxu0 0.0
    %340 = vmatpush1.xpose.msra.mxu0 0.0
    %341 = vmatprep.subr.mxu0 0.0
    %342 = vmatpush1.xpose.msra.mxu0 0.0
    %343 = vmatprep.subr.mxu0 0.0
    %344 = vmatpush1.xpose.msra.mxu0 0.0
    %345 = vmatprep.subr.mxu0 0.0
    %346 = vmatpush1.xpose.msra.mxu0 0.0
    %347 = vmatprep.subr.mxu0 0.0
    %348 = vmatpush1.xpose.msra.mxu0 0.0
    %349 = vmatprep.subr.mxu0 0.0
    %350 = vmatpush1.xpose.msra.mxu0 0.0
    %351 = vmatprep.subr.mxu0 0.0
    %352 = vmatpush1.xpose.msra.mxu0 0.0
    %353 = vmatprep.subr.mxu0 0.0
    %354 = vmatpush1.xpose.msra.mxu0 0.0
    %355 = vmatprep.subr.mxu0 0.0
    %356 = vmatpush1.xpose.msra.mxu0 0.0
    %357 = vmatprep.subr.mxu0 0.0
    %358 = vmatpush1.xpose.msra.mxu0 0.0
    %359 = vmatprep.subr.mxu0 0.0
    %360 = vmatpush1.xpose.msra.mxu0 0.0
    %361 = vmatprep.subr.mxu0 0.0
    %362 = vmatpush1.xpose.msra.mxu0 0.0
    %363 = vmatprep.subr.mxu0 0.0
    %364 = vmatpush1.xpose.msra.mxu0 0.0
    %365 = vmatprep.subr.mxu0 0.0
    %366 = vmatpush1.xpose.msra.mxu0 0.0
    %367 = vmatprep.subr.mxu0 0.0
    %368 = vmatpush1.xpose.msra.mxu0 0.0
    %369 = vmatprep.subr.mxu0 0.0
    %370 = vmatpush1.xpose.msra.mxu0 0.0
    %371 = vmatprep.subr.mxu0 0.0
    %372 = vmatpush1.xpose.msra.mxu0 0.0
    %373 = vmatprep.subr.mxu0 0.0
    %374 = vmatpush1.xpose.msra.mxu0 0.0
    %375 = vmatprep.subr.mxu0 0.0
    %376 = vmatpush1.xpose.msra.mxu0 0.0
    %377 = vmatprep.subr.mxu0 0.0
    %378 = vmatpush1.xpose.msra.mxu0 0.0
    %379 = vmatprep.mubr.f32.mxu0 0.0
    %380 = vmatmul.mubr.f32.gmra.mrb[0].mxu0 %v288
    %v381 = vpop.f32.mrb[0].mxu0
    %v382 = vadd.f32 %v233, %v381
    %v383 = vpop.f32.mrb[0].mxu0
    %384 = vmatprep.mubr.f32.mxu0 0.0
    %385 = vmatmul.mubr.f32.gmra.mrb[0].mxu0 %v291
    %v386 = vpop.f32.mrb[0].mxu0
    %v387 = vadd.f32 %v234, %v386
    %v388 = vpop.f32.mrb[0].mxu0
    %389 = vmatprep.mubr.f32.mxu0 0.0
    %390 = vmatmul.mubr.f32.gmra.mrb[0].mxu0 %v294
    %v391 = vpop.f32.mrb[0].mxu0
    %v392 = vadd.f32 %v235, %v391
    %v393 = vpop.f32.mrb[0].mxu0
    %394 = vmatprep.mubr.f32.mxu0 0.0
    %395 = vmatmul.mubr.f32.gmra.mrb[0].mxu0 %v297
    %v396 = vpop.f32.mrb[0].mxu0
    %v397 = vadd.f32 %v236, %v396
    %v398 = vpop.f32.mrb[0].mxu0
    %399 = vmatprep.mubr.f32.mxu0 0.0
    %400 = vmatmul.mubr.f32.gmra.mrb[0].mxu0 %v300
    %v401 = vpop.f32.mrb[0].mxu0
    %v402 = vadd.f32 %v237, %v401
    %v403 = vpop.f32.mrb[0].mxu0
    %404 = vmatprep.mubr.f32.mxu0 0.0
    %405 = vmatmul.mubr.f32.gmra.mrb[0].mxu0 %v303
    %v406 = vpop.f32.mrb[0].mxu0
    %v407 = vadd.f32 %v238, %v406
    %v408 = vpop.f32.mrb[0].mxu0
    %409 = vmatprep.mubr.f32.mxu0 0.0
    %410 = vmatmul.mubr.f32.gmra.mrb[0].mxu0 %v306
    %v411 = vpop.f32.mrb[0].mxu0
    %v412 = vadd.f32 %v239, %v411
    %v413 = vpop.f32.mrb[0].mxu0
    %414 = vmatprep.mubr.f32.mxu0 0.0
    %415 = vmatmul.mubr.f32.gmra.mrb[0].mxu0 %v309
    %v416 = vpop.f32.mrb[0].mxu0
    %v417 = vadd.f32 %v240, %v416
    %v418 = vpop.f32.mrb[0].mxu0
    %419 = vdwg.mxu0
    %vm420 = vcmask 130048
    %v421 = vsel %vm420, %v382, -inf
    %422 = vmax.xlane.f32.xlu0 %v421
    %v423 = vpop.xlane.xlu0 %422
    %v424 = vsel %vm420, %v387, -inf
    %425 = vmax.xlane.f32.xlu0 %v424
    %v426 = vpop.xlane.xlu0 %425
    %v427 = vsel %vm420, %v392, -inf
    %428 = vmax.xlane.f32.xlu0 %v427
    %v429 = vpop.xlane.xlu0 %428
    %v430 = vsel %vm420, %v397, -inf
    %431 = vmax.xlane.f32.xlu0 %v430
    %v432 = vpop.xlane.xlu0 %431
    %v433 = vsel %vm420, %v402, -inf
    %434 = vmax.xlane.f32.xlu0 %v433
    %v435 = vpop.xlane.xlu0 %434
    %v436 = vsel %vm420, %v407, -inf
    %437 = vmax.xlane.f32.xlu0 %v436
    %v438 = vpop.xlane.xlu0 %437
    %v439 = vsel %vm420, %v412, -inf
    %440 = vmax.xlane.f32.xlu0 %v439
    %v441 = vpop.xlane.xlu0 %440
    %v442 = vsel %vm420, %v417, -inf
    %443 = vmax.xlane.f32.xlu0 %v442
    %v444 = vpop.xlane.xlu0 %443
    %v445 = vsub.f32 %v382, %v423
    %v446 = vsub.f32 %v387, %v426
    %v447 = vsub.f32 %v392, %v429
    %v448 = vsub.f32 %v397, %v432
    %v449 = vsub.f32 %v402, %v435
    %v450 = vsub.f32 %v407, %v438
    %v451 = vsub.f32 %v412, %v441
    %v452 = vsub.f32 %v417, %v444
    %v453 = vmul.f32 %v445, 1.442695
    %v454 = vpow.pop %v453
    %v455 = vmul.f32 %v446, 1.442695
    %v456 = vpow.pop %v455
    %v457 = vmul.f32 %v447, 1.442695
    %v458 = vpow.pop %v457
    %v459 = vmul.f32 %v448, 1.442695
    %v460 = vpow.pop %v459
    %v461 = vmul.f32 %v449, 1.442695
    %v462 = vpow.pop %v461
    %v463 = vmul.f32 %v450, 1.442695
    %v464 = vpow.pop %v463
    %v465 = vmul.f32 %v451, 1.442695
    %v466 = vpow.pop %v465
    %v467 = vmul.f32 %v452, 1.442695
    %v468 = vpow.pop %v467
    %v469 = vsel %vm420, %v454, 0.0
    %470 = vadd.xlane.f32.xlu0 %v469
    %v471 = vpop.xlane.xlu0 %470
    %v472 = vsel %vm420, %v456, 0.0
    %473 = vadd.xlane.f32.xlu0 %v472
    %v474 = vpop.xlane.xlu0 %473
    %v475 = vsel %vm420, %v458, 0.0
    %476 = vadd.xlane.f32.xlu0 %v475
    %v477 = vpop.xlane.xlu0 %476
    %v478 = vsel %vm420, %v460, 0.0
    %479 = vadd.xlane.f32.xlu0 %v478
    %v480 = vpop.xlane.xlu0 %479
    %v481 = vsel %vm420, %v462, 0.0
    %482 = vadd.xlane.f32.xlu0 %v481
    %v483 = vpop.xlane.xlu0 %482
    %v484 = vsel %vm420, %v464, 0.0
    %485 = vadd.xlane.f32.xlu0 %v484
    %v486 = vpop.xlane.xlu0 %485
    %v487 = vsel %vm420, %v466, 0.0
    %488 = vadd.xlane.f32.xlu0 %v487
    %v489 = vpop.xlane.xlu0 %488
    %v490 = vsel %vm420, %v468, 0.0
    %491 = vadd.xlane.f32.xlu0 %v490
    %v492 = vpop.xlane.xlu0 %491
    %v493 = vrcp.pop %v471
    %v494 = vmul.f32 %v454, %v493
    %v495 = vrcp.pop %v474
    %v496 = vmul.f32 %v456, %v495
    %v497 = vrcp.pop %v477
    %v498 = vmul.f32 %v458, %v497
    %v499 = vrcp.pop %v480
    %v500 = vmul.f32 %v460, %v499
    %v501 = vrcp.pop %v483
    %v502 = vmul.f32 %v462, %v501
    %v503 = vrcp.pop %v486
    %v504 = vmul.f32 %v464, %v503
    %v505 = vrcp.pop %v489
    %v506 = vmul.f32 %v466, %v505
    %v507 = vrcp.pop %v492
    %v508 = vmul.f32 %v468, %v507
    %511 = vrot.lane.b32.xlu0 %v173, 64
    %v512 = vpop.permute.xlu0 %511
    %513 = vrot.lane.b32.xlu0 %v179, 64
    %v514 = vpop.permute.xlu0 %513
    %v518 = vsel %vm420, %v494, 0
    %v521 = vsel %vm420, %v496, 0
    %v524 = vsel %vm420, %v498, 0
    %v527 = vsel %vm420, %v500, 0
    %v530 = vsel %vm420, %v502, 0
    %v533 = vsel %vm420, %v504, 0
    %v536 = vsel %vm420, %v506, 0
    %v539 = vsel %vm420, %v508, 0
    %541 = vmatprep.subr.mxu0 0.0
    %542 = vmatpush1.msra.mxu0 %v512
    %543 = vmatprep.subr.mxu0 0.0
    %544 = vmatpush1.msra.mxu0 %v514
    %545 = vmatprep.subr.mxu0 0.0
    %546 = vmatpush1.msra.mxu0 0.0
    %547 = vmatprep.subr.mxu0 0.0
    %548 = vmatpush1.msra.mxu0 0.0
    %549 = vmatprep.subr.mxu0 0.0
    %550 = vmatpush1.msra.mxu0 0.0
    %551 = vmatprep.subr.mxu0 0.0
    %552 = vmatpush1.msra.mxu0 0.0
    %553 = vmatprep.subr.mxu0 0.0
    %554 = vmatpush1.msra.mxu0 0.0
    %555 = vmatprep.subr.mxu0 0.0
    %556 = vmatpush1.msra.mxu0 0.0
    %557 = vmatprep.subr.mxu0 0.0
    %558 = vmatpush1.msra.mxu0 0.0
    %559 = vmatprep.subr.mxu0 0.0
    %560 = vmatpush1.msra.mxu0 0.0
    %561 = vmatprep.subr.mxu0 0.0
    %562 = vmatpush1.msra.mxu0 0.0
    %563 = vmatprep.subr.mxu0 0.0
    %564 = vmatpush1.msra.mxu0 0.0
    %565 = vmatprep.subr.mxu0 0.0
    %566 = vmatpush1.msra.mxu0 0.0
    %567 = vmatprep.subr.mxu0 0.0
    %568 = vmatpush1.msra.mxu0 0.0
    %569 = vmatprep.subr.mxu0 0.0
    %570 = vmatpush1.msra.mxu0 0.0
    %571 = vmatprep.subr.mxu0 0.0
    %572 = vmatpush1.msra.mxu0 0.0
    %573 = vmatprep.subr.mxu0 0.0
    %574 = vmatpush1.msra.mxu0 0.0
    %575 = vmatprep.subr.mxu0 0.0
    %576 = vmatpush1.msra.mxu0 0.0
    %577 = vmatprep.subr.mxu0 0.0
    %578 = vmatpush1.msra.mxu0 0.0
    %579 = vmatprep.subr.mxu0 0.0
    %580 = vmatpush1.msra.mxu0 0.0
    %581 = vmatprep.subr.mxu0 0.0
    %582 = vmatpush1.msra.mxu0 0.0
    %583 = vmatprep.subr.mxu0 0.0
    %584 = vmatpush1.msra.mxu0 0.0
    %585 = vmatprep.subr.mxu0 0.0
    %586 = vmatpush1.msra.mxu0 0.0
    %587 = vmatprep.subr.mxu0 0.0
    %588 = vmatpush1.msra.mxu0 0.0
    %589 = vmatprep.subr.mxu0 0.0
    %590 = vmatpush1.msra.mxu0 0.0
    %591 = vmatprep.subr.mxu0 0.0
    %592 = vmatpush1.msra.mxu0 0.0
    %593 = vmatprep.subr.mxu0 0.0
    %594 = vmatpush1.msra.mxu0 0.0
    %595 = vmatprep.subr.mxu0 0.0
    %596 = vmatpush1.msra.mxu0 0.0
    %597 = vmatprep.subr.mxu0 0.0
    %598 = vmatpush1.msra.mxu0 0.0
    %599 = vmatprep.subr.mxu0 0.0
    %600 = vmatpush1.msra.mxu0 0.0
    %601 = vmatprep.subr.mxu0 0.0
    %602 = vmatpush1.msra.mxu0 0.0
    %603 = vmatprep.subr.mxu0 0.0
    %604 = vmatpush1.msra.mxu0 0.0
    %605 = vmatprep.mubr.f32.mxu0 0.0
    %606 = vmatmul.mubr.f32.gmra.mrb[0].mxu0 %v518
    %v607 = vpop.f32.mrb[0].mxu0
    %v608 = vadd.f32 0.0, %v607
    %v609 = vpop.f32.mrb[0].mxu0
    %610 = vmatprep.mubr.f32.mxu0 0.0
    %611 = vmatmul.mubr.f32.gmra.mrb[0].mxu0 %v521
    %v612 = vpop.f32.mrb[0].mxu0
    %v613 = vadd.f32 0.0, %v612
    %v614 = vpop.f32.mrb[0].mxu0
    %615 = vmatprep.mubr.f32.mxu0 0.0
    %616 = vmatmul.mubr.f32.gmra.mrb[0].mxu0 %v524
    %v617 = vpop.f32.mrb[0].mxu0
    %v618 = vadd.f32 0.0, %v617
    %v619 = vpop.f32.mrb[0].mxu0
    %620 = vmatprep.mubr.f32.mxu0 0.0
    %621 = vmatmul.mubr.f32.gmra.mrb[0].mxu0 %v527
    %v622 = vpop.f32.mrb[0].mxu0
    %v623 = vadd.f32 0.0, %v622
    %v624 = vpop.f32.mrb[0].mxu0
    %625 = vmatprep.mubr.f32.mxu0 0.0
    %626 = vmatmul.mubr.f32.gmra.mrb[0].mxu0 %v530
    %v627 = vpop.f32.mrb[0].mxu0
    %v628 = vadd.f32 0.0, %v627
    %v629 = vpop.f32.mrb[0].mxu0
    %630 = vmatprep.mubr.f32.mxu0 0.0
    %631 = vmatmul.mubr.f32.gmra.mrb[0].mxu0 %v533
    %v632 = vpop.f32.mrb[0].mxu0
    %v633 = vadd.f32 0.0, %v632
    %v634 = vpop.f32.mrb[0].mxu0
    %635 = vmatprep.mubr.f32.mxu0 0.0
    %636 = vmatmul.mubr.f32.gmra.mrb[0].mxu0 %v536
    %v637 = vpop.f32.mrb[0].mxu0
    %v638 = vadd.f32 0.0, %v637
    %v639 = vpop.f32.mrb[0].mxu0
    %640 = vmatprep.mubr.f32.mxu0 0.0
    %641 = vmatmul.mubr.f32.gmra.mrb[0].mxu0 %v539
    %v642 = vpop.f32.mrb[0].mxu0
    %v643 = vadd.f32 0.0, %v642
    %v644 = vpop.f32.mrb[0].mxu0
    %645 = vdwg.mxu0
    %v646 = vmul.f32 %v608, %v250
    %v647 = vmul.f32 %v613, %v252
    %v648 = vmul.f32 %v618, %v254
    %v649 = vmul.f32 %v623, %v256
    %v650 = vmul.f32 %v628, %v258
    %v651 = vmul.f32 %v633, %v260
    %v652 = vmul.f32 %v638, %v262
    %v653 = vmul.f32 %v643, %v264
    %v654 = vadd.f32 %v646, %v648
    %v655 = vadd.f32 %v647, %v649
    %v656 = vadd.f32 %v654, %v650
    %v657 = vadd.f32 %v655, %v651
    %v658 = vadd.f32 %v656, %v652
    %v659 = vadd.f32 %v657, %v653
    %v660 = vld [vmem:[%s3 + $0x8] sm:$0xff]
    %v661 = vld [vmem:[%s3 + $0x20] sm:$0xff]
    %v662 = vld [vmem:[%s3 + $0x38] sm:$0xff]
    %v663 = vld [vmem:[%s3 + $0x50] sm:$0xff]
    %v664 = vlaneseq
    %v665 = vshrl.u32 %v664, 7
    %v666 = vsub.s32 0, %v665
    %v667 = vrot.slane %v28, %v666
    %v669 = vsel %vm33, %v658, 0
    %v672 = vsel %vm33, %v659, 0
    %674 = vmatprep.subr.mxu0 0.0
    %675 = vmatpush1.msra.mxu0 %v660
    %676 = vmatprep.subr.mxu0 0.0
    %677 = vmatpush1.msra.mxu0 %v661
    %678 = vmatprep.subr.mxu0 0.0
    %679 = vmatpush1.msra.mxu0 %v662
    %680 = vmatprep.subr.mxu0 0.0
    %681 = vmatpush1.msra.mxu0 %v663
    %682 = vmatprep.subr.mxu0 0.0
    %683 = vmatpush1.msra.mxu0 0.0
    %684 = vmatprep.subr.mxu0 0.0
    %685 = vmatpush1.msra.mxu0 0.0
    %686 = vmatprep.subr.mxu0 0.0
    %687 = vmatpush1.msra.mxu0 0.0
    %688 = vmatprep.subr.mxu0 0.0
    %689 = vmatpush1.msra.mxu0 0.0
    %690 = vmatprep.subr.mxu0 0.0
    %691 = vmatpush1.msra.mxu0 0.0
    %692 = vmatprep.subr.mxu0 0.0
    %693 = vmatpush1.msra.mxu0 0.0
    %694 = vmatprep.subr.mxu0 0.0
    %695 = vmatpush1.msra.mxu0 0.0
    %696 = vmatprep.subr.mxu0 0.0
    %697 = vmatpush1.msra.mxu0 0.0
    %698 = vmatprep.subr.mxu0 0.0
    %699 = vmatpush1.msra.mxu0 0.0
    %700 = vmatprep.subr.mxu0 0.0
    %701 = vmatpush1.msra.mxu0 0.0
    %702 = vmatprep.subr.mxu0 0.0
    %703 = vmatpush1.msra.mxu0 0.0
    %704 = vmatprep.subr.mxu0 0.0
    %705 = vmatpush1.msra.mxu0 0.0
    %706 = vmatprep.subr.mxu0 0.0
    %707 = vmatpush1.msra.mxu0 0.0
    %708 = vmatprep.subr.mxu0 0.0
    %709 = vmatpush1.msra.mxu0 0.0
    %710 = vmatprep.subr.mxu0 0.0
    %711 = vmatpush1.msra.mxu0 0.0
    %712 = vmatprep.subr.mxu0 0.0
    %713 = vmatpush1.msra.mxu0 0.0
    %714 = vmatprep.subr.mxu0 0.0
    %715 = vmatpush1.msra.mxu0 0.0
    %716 = vmatprep.subr.mxu0 0.0
    %717 = vmatpush1.msra.mxu0 0.0
    %718 = vmatprep.subr.mxu0 0.0
    %719 = vmatpush1.msra.mxu0 0.0
    %720 = vmatprep.subr.mxu0 0.0
    %721 = vmatpush1.msra.mxu0 0.0
    %722 = vmatprep.subr.mxu0 0.0
    %723 = vmatpush1.msra.mxu0 0.0
    %724 = vmatprep.subr.mxu0 0.0
    %725 = vmatpush1.msra.mxu0 0.0
    %726 = vmatprep.subr.mxu0 0.0
    %727 = vmatpush1.msra.mxu0 0.0
    %728 = vmatprep.subr.mxu0 0.0
    %729 = vmatpush1.msra.mxu0 0.0
    %730 = vmatprep.subr.mxu0 0.0
    %731 = vmatpush1.msra.mxu0 0.0
    %732 = vmatprep.subr.mxu0 0.0
    %733 = vmatpush1.msra.mxu0 0.0
    %734 = vmatprep.subr.mxu0 0.0
    %735 = vmatpush1.msra.mxu0 0.0
    %736 = vmatprep.subr.mxu0 0.0
    %737 = vmatpush1.msra.mxu0 0.0
    %738 = vmatprep.mubr.f32.mxu0 0.0
    %739 = vmatmul.mubr.f32.gmra.mrb[0].mxu0 %v669
    %v740 = vpop.f32.mrb[0].mxu0
    %v741 = vadd.f32 %v667, %v740
    %v742 = vpop.f32.mrb[0].mxu0
    %743 = vmatprep.mubr.f32.mxu0 0.0
    %744 = vmatmul.mubr.f32.gmra.mrb[0].mxu0 %v672
    %v745 = vpop.f32.mrb[0].mxu0
    %v746 = vadd.f32 %v667, %v745
    %v747 = vpop.f32.mrb[0].mxu0
    %748 = vdwg.mxu0
    %v749 = vadd.f32 %v24, %v741
    %v750 = vadd.f32 %v25, %v746
    %v751 = vmul.f32 %v749, %v749
    %v752 = vmul.f32 %v750, %v750
    %v753 = vsel %vm33, %v751, 0.0
    %754 = vadd.xlane.f32.xlu0 %v753
    %v755 = vpop.xlane.xlu0 %754
    %v756 = vsel %vm33, %v752, 0.0
    %757 = vadd.xlane.f32.xlu0 %v756
    %v758 = vpop.xlane.xlu0 %757
    %v759 = vmul.f32 %v755, %v40
    %v760 = vmul.f32 %v758, %v40
    %v761 = vadd.f32 %v759, 1e-06
    %v762 = vadd.f32 %v760, 1e-06
    %v763 = vrsqrt.pop %v761
    %v764 = vrsqrt.pop %v762
    %v765 = vmul.f32 %v749, %v763
    %v766 = vmul.f32 %v750, %v764
    %v767 = vlaneseq
    %v768 = vshrl.u32 %v767, 7
    %v769 = vsub.s32 0, %v768
    %v770 = vrot.slane %v27, %v769
    %v771 = vmul.f32 %v765, %v770
    %v772 = vmul.f32 %v766, %v770
    %v773 = vld [vmem:[%s3] sm:$0xff]
    %v774 = vld [vmem:[%s3 + $0x18] sm:$0xff]
    %v775 = vld [vmem:[%s3 + $0x30] sm:$0xff]
    %v776 = vld [vmem:[%s3 + $0x48] sm:$0xff]
    %v777 = vlaneseq
    %v778 = vshrl.u32 %v777, 7
    %v779 = vsub.s32 0, %v778
    %v780 = vrot.slane %v30, %v779
    %v782 = vsel %vm33, %v771, 0
    %v785 = vsel %vm33, %v772, 0
    %787 = vmatprep.subr.mxu0 0.0
    %788 = vmatpush1.msra.mxu0 %v773
    %789 = vmatprep.subr.mxu0 0.0
    %790 = vmatpush1.msra.mxu0 %v774
    %791 = vmatprep.subr.mxu0 0.0
    %792 = vmatpush1.msra.mxu0 %v775
    %793 = vmatprep.subr.mxu0 0.0
    %794 = vmatpush1.msra.mxu0 %v776
    %795 = vmatprep.subr.mxu0 0.0
    %796 = vmatpush1.msra.mxu0 0.0
    %797 = vmatprep.subr.mxu0 0.0
    %798 = vmatpush1.msra.mxu0 0.0
    %799 = vmatprep.subr.mxu0 0.0
    %800 = vmatpush1.msra.mxu0 0.0
    %801 = vmatprep.subr.mxu0 0.0
    %802 = vmatpush1.msra.mxu0 0.0
    %803 = vmatprep.subr.mxu0 0.0
    %804 = vmatpush1.msra.mxu0 0.0
    %805 = vmatprep.subr.mxu0 0.0
    %806 = vmatpush1.msra.mxu0 0.0
    %807 = vmatprep.subr.mxu0 0.0
    %808 = vmatpush1.msra.mxu0 0.0
    %809 = vmatprep.subr.mxu0 0.0
    %810 = vmatpush1.msra.mxu0 0.0
    %811 = vmatprep.subr.mxu0 0.0
    %812 = vmatpush1.msra.mxu0 0.0
    %813 = vmatprep.subr.mxu0 0.0
    %814 = vmatpush1.msra.mxu0 0.0
    %815 = vmatprep.subr.mxu0 0.0
    %816 = vmatpush1.msra.mxu0 0.0
    %817 = vmatprep.subr.mxu0 0.0
    %818 = vmatpush1.msra.mxu0 0.0
    %819 = vmatprep.subr.mxu0 0.0
    %820 = vmatpush1.msra.mxu0 0.0
    %821 = vmatprep.subr.mxu0 0.0
    %822 = vmatpush1.msra.mxu0 0.0
    %823 = vmatprep.subr.mxu0 0.0
    %824 = vmatpush1.msra.mxu0 0.0
    %825 = vmatprep.subr.mxu0 0.0
    %826 = vmatpush1.msra.mxu0 0.0
    %827 = vmatprep.subr.mxu0 0.0
    %828 = vmatpush1.msra.mxu0 0.0
    %829 = vmatprep.subr.mxu0 0.0
    %830 = vmatpush1.msra.mxu0 0.0
    %831 = vmatprep.subr.mxu0 0.0
    %832 = vmatpush1.msra.mxu0 0.0
    %833 = vmatprep.subr.mxu0 0.0
    %834 = vmatpush1.msra.mxu0 0.0
    %835 = vmatprep.subr.mxu0 0.0
    %836 = vmatpush1.msra.mxu0 0.0
    %837 = vmatprep.subr.mxu0 0.0
    %838 = vmatpush1.msra.mxu0 0.0
    %839 = vmatprep.subr.mxu0 0.0
    %840 = vmatpush1.msra.mxu0 0.0
    %841 = vmatprep.subr.mxu0 0.0
    %842 = vmatpush1.msra.mxu0 0.0
    %843 = vmatprep.subr.mxu0 0.0
    %844 = vmatpush1.msra.mxu0 0.0
    %845 = vmatprep.subr.mxu0 0.0
    %846 = vmatpush1.msra.mxu0 0.0
    %847 = vmatprep.subr.mxu0 0.0
    %848 = vmatpush1.msra.mxu0 0.0
    %849 = vmatprep.subr.mxu0 0.0
    %850 = vmatpush1.msra.mxu0 0.0
    %851 = vmatprep.mubr.f32.mxu0 0.0
    %852 = vmatmul.mubr.f32.gmra.mrb[0].mxu0 %v782
    %v853 = vpop.f32.mrb[0].mxu0
    %v854 = vadd.f32 %v780, %v853
    %v855 = vpop.f32.mrb[0].mxu0
    %856 = vmatprep.mubr.f32.mxu0 0.0
    %857 = vmatmul.mubr.f32.gmra.mrb[0].mxu0 %v785
    %v858 = vpop.f32.mrb[0].mxu0
    %v859 = vadd.f32 %v780, %v858
    %v860 = vpop.f32.mrb[0].mxu0
    %861 = vdwg.mxu0
    %v862 = vmul.f32 %v854, 0.5
    %v863 = vmul.f32 %v859, 0.5
    %v864 = vmul.f32 %v854, 0.70710677
    %v865 = vmul.f32 %v859, 0.70710677
    %v866 = vand.u32 2147483647, %v864
    %v867 = vand.u32 2147483647, %v865
    %v868 = vmul.f32 %v866, 0.3275911
    %v869 = vmul.f32 %v867, 0.3275911
    %v870 = vadd.f32 %v868, 1.0
    %v871 = vadd.f32 %v869, 1.0
    %v872 = vrcp.pop %v870
    %v873 = vmul.f32 1.0, %v872
    %v874 = vrcp.pop %v871
    %v875 = vmul.f32 1.0, %v874
    %v876 = vmul.f32 %v873, 1.0614054
    %v877 = vmul.f32 %v875, 1.0614054
    %v878 = vadd.f32 %v876, -1.4531521
    %v879 = vadd.f32 %v877, -1.4531521
    %v880 = vmul.f32 %v878, %v873
    %v881 = vmul.f32 %v879, %v875
    %v882 = vadd.f32 %v880, 1.4214138
    %v883 = vadd.f32 %v881, 1.4214138
    %v884 = vmul.f32 %v882, %v873
    %v885 = vmul.f32 %v883, %v875
    %v886 = vadd.f32 %v884, -0.28449672
    %v887 = vadd.f32 %v885, -0.28449672
    %v888 = vmul.f32 %v886, %v873
    %v889 = vmul.f32 %v887, %v875
    %v890 = vadd.f32 %v888, 0.2548296
    %v891 = vadd.f32 %v889, 0.2548296
    %v892 = vmul.f32 %v890, %v873
    %v893 = vmul.f32 %v891, %v875
    %v894 = vsub.f32 0.0, %v866
    %v895 = vsub.f32 0.0, %v867
    %v896 = vmul.f32 %v894, %v866
    %v897 = vmul.f32 %v895, %v867
    %v898 = vmul.f32 %v896, 1.442695
    %v899 = vpow.pop %v898
    %v900 = vmul.f32 %v897, 1.442695
    %v901 = vpow.pop %v900
    %v902 = vmul.f32 %v892, %v899
    %v903 = vmul.f32 %v893, %v901
    %v904 = vsub.f32 1.0, %v902
    %v905 = vsub.f32 1.0, %v903
    %vm906 = vcmp.ge.f32.partialorder %v864, 0.0
    %vm907 = vcmp.ge.f32.partialorder %v865, 0.0
    %v908 = vsub.f32 0.0, %v904
    %v909 = vsub.f32 0.0, %v905
    %v910 = vsel %vm906, %v904, %v908
    %v911 = vsel %vm907, %v905, %v909
    %v912 = vadd.f32 %v910, 1.0
    %v913 = vadd.f32 %v911, 1.0
    %v914 = vmul.f32 %v862, %v912
    %v915 = vmul.f32 %v863, %v913
    %v916 = vld [vmem:[%s4] sm:$0xff]
    %v917 = vld [vmem:[%s4 + $0x8] sm:$0xff]
    %v918 = vld [vmem:[%s4 + $0x10] sm:$0xff]
    %v919 = vld [vmem:[%s4 + $0x18] sm:$0xff]
    %v920 = vld [vmem:[%s4 + $0x20] sm:$0xff]
    %v921 = vld [vmem:[%s4 + $0x28] sm:$0xff]
    %v922 = vld [vmem:[%s4 + $0x30] sm:$0xff]
    %v923 = vld [vmem:[%s4 + $0x38] sm:$0xff]
    %v924 = vld [vmem:[%s4 + $0x40] sm:$0xff]
    %v925 = vld [vmem:[%s4 + $0x48] sm:$0xff]
    %v926 = vld [vmem:[%s4 + $0x50] sm:$0xff]
    %v927 = vld [vmem:[%s4 + $0x58] sm:$0xff]
    %v928 = vld [vmem:[%s4 + $0x60] sm:$0xff]
    %v929 = vld [vmem:[%s4 + $0x68] sm:$0xff]
    %v930 = vld [vmem:[%s4 + $0x70] sm:$0xff]
    %v931 = vld [vmem:[%s4 + $0x78] sm:$0xff]
    %v932 = vlaneseq
    %v933 = vshrl.u32 %v932, 7
    %v934 = vsub.s32 0, %v933
    %v935 = vrot.slane %v29, %v934
    %936 = vmatprep.subr.mxu0 0.0
    %937 = vmatpush1.msra.mxu0 %v916
    %938 = vmatprep.subr.mxu0 0.0
    %939 = vmatpush1.msra.mxu0 %v917
    %940 = vmatprep.subr.mxu0 0.0
    %941 = vmatpush1.msra.mxu0 %v918
    %942 = vmatprep.subr.mxu0 0.0
    %943 = vmatpush1.msra.mxu0 %v919
    %944 = vmatprep.subr.mxu0 0.0
    %945 = vmatpush1.msra.mxu0 %v920
    %946 = vmatprep.subr.mxu0 0.0
    %947 = vmatpush1.msra.mxu0 %v921
    %948 = vmatprep.subr.mxu0 0.0
    %949 = vmatpush1.msra.mxu0 %v922
    %950 = vmatprep.subr.mxu0 0.0
    %951 = vmatpush1.msra.mxu0 %v923
    %952 = vmatprep.subr.mxu0 0.0
    %953 = vmatpush1.msra.mxu0 %v924
    %954 = vmatprep.subr.mxu0 0.0
    %955 = vmatpush1.msra.mxu0 %v925
    %956 = vmatprep.subr.mxu0 0.0
    %957 = vmatpush1.msra.mxu0 %v926
    %958 = vmatprep.subr.mxu0 0.0
    %959 = vmatpush1.msra.mxu0 %v927
    %960 = vmatprep.subr.mxu0 0.0
    %961 = vmatpush1.msra.mxu0 %v928
    %962 = vmatprep.subr.mxu0 0.0
    %963 = vmatpush1.msra.mxu0 %v929
    %964 = vmatprep.subr.mxu0 0.0
    %965 = vmatpush1.msra.mxu0 %v930
    %966 = vmatprep.subr.mxu0 0.0
    %967 = vmatpush1.msra.mxu0 %v931
    %968 = vmatprep.subr.mxu0 0.0
    %969 = vmatpush1.msra.mxu0 0.0
    %970 = vmatprep.subr.mxu0 0.0
    %971 = vmatpush1.msra.mxu0 0.0
    %972 = vmatprep.subr.mxu0 0.0
    %973 = vmatpush1.msra.mxu0 0.0
    %974 = vmatprep.subr.mxu0 0.0
    %975 = vmatpush1.msra.mxu0 0.0
    %976 = vmatprep.subr.mxu0 0.0
    %977 = vmatpush1.msra.mxu0 0.0
    %978 = vmatprep.subr.mxu0 0.0
    %979 = vmatpush1.msra.mxu0 0.0
    %980 = vmatprep.subr.mxu0 0.0
    %981 = vmatpush1.msra.mxu0 0.0
    %982 = vmatprep.subr.mxu0 0.0
    %983 = vmatpush1.msra.mxu0 0.0
    %984 = vmatprep.subr.mxu0 0.0
    %985 = vmatpush1.msra.mxu0 0.0
    %986 = vmatprep.subr.mxu0 0.0
    %987 = vmatpush1.msra.mxu0 0.0
    %988 = vmatprep.subr.mxu0 0.0
    %989 = vmatpush1.msra.mxu0 0.0
    %990 = vmatprep.subr.mxu0 0.0
    %991 = vmatpush1.msra.mxu0 0.0
    %992 = vmatprep.subr.mxu0 0.0
    %993 = vmatpush1.msra.mxu0 0.0
    %994 = vmatprep.subr.mxu0 0.0
    %995 = vmatpush1.msra.mxu0 0.0
    %996 = vmatprep.subr.mxu0 0.0
    %997 = vmatpush1.msra.mxu0 0.0
    %998 = vmatprep.subr.mxu0 0.0
    %999 = vmatpush1.msra.mxu0 0.0
    %1000 = vmatprep.mubr.f32.mxu0 0.0
    %1001 = vmatmul.mubr.f32.gmra.mrb[0].mxu0 %v914
    %v1002 = vpop.f32.mrb[0].mxu0
    %v1003 = vadd.f32 %v935, %v1002
    %v1004 = vpop.f32.mrb[0].mxu0
    %1005 = vmatprep.mubr.f32.mxu0 0.0
    %1006 = vmatmul.mubr.f32.gmra.mrb[0].mxu0 %v915
    %v1007 = vpop.f32.mrb[0].mxu0
    %v1008 = vadd.f32 %v935, %v1007
    %v1009 = vpop.f32.mrb[0].mxu0
    %1010 = vdwg.mxu0
    %v1011 = vadd.f32 %v749, %v1003
    %v1012 = vadd.f32 %v750, %v1008
    %1013 = vst.msk [vmem:[#allocation2] sm:$0xff] %vm33, %v1011
    %1014 = vst.msk [vmem:[#allocation2 + $0x8] sm:$0xff] %vm33, %v1012
    // Predicated region
    $region26: #{tpu_custom_call.1} parent=1 // pred_check
      _
    $region27: #{tpu_custom_call.1} parent=1 // pred_check_branch
      %1016 = sbr.rel (0) target = $region29
    $region28: #{tpu_custom_call.1} parent=1 // pred_region
      %s1018 = ssub.s32 256, 256
      %1019 = vsyncadd [#allocation3], %s1018
      %s1020 = sshll.u32 [#allocation2], 4
      %s1021 = int_to_ptr.vmem [resolvable:$true] %s1020
      %1026 = dma.vmem_to_hbm [thread:$0]  %s1021, 256, %s6, [#allocation3], 128, 128, 8
    $region29: #{tpu_custom_call.1} parent=1 // pred_fallthru
      _
    // Predicated region
    $region30: #{tpu_custom_call.1} parent=1 // pred_check
      _
    $region31: #{tpu_custom_call.1} parent=1 // pred_check_branch
      %1028 = sbr.rel (0) target = $region33
    $region32: #{tpu_custom_call.1} parent=1 // pred_region
      %1029 = dma.done [#allocation3], 256
    $region33: #{tpu_custom_call.1} parent=1 // pred_fallthru
      _
    %1030 = vsyncpa [#allocation3], 1

</llo_original>
